<compile_context>
chip_gen: v5e
topology: v5e:2x2
jax: 0.10.0
libtpu: 0.0.40
codegen_flags: <defaults>
</compile_context>

<pallas_src>
import functools

import jax
import jax.numpy as jnp
from jax.experimental import pallas as pl
from jax.experimental.pallas import tpu as pltpu


def _fused_decoder_kernel(*refs, n_layers: int):
    # refs = (x_ref, w0_ref, b0_ref, w1_ref, b1_ref, ..., o_ref)
    # x_ref: (tm, d0) bf16, w_i: (d_i, d_{i+1}) bf16, b_i: (1, d_{i+1}) f32,
    # o_ref: (tm, d_last_padded) f32.
    x_ref = refs[0]
    o_ref = refs[-1]

    h = x_ref[...]  # bf16 activations stay in registers/VMEM between layers
    for i in range(n_layers):
        w = refs[1 + 2 * i][...]
        b = refs[2 + 2 * i][...]
        y = jnp.dot(h, w, preferred_element_type=jnp.float32) + b  # f32 accum
        if i < n_layers - 1:
            h = jnp.maximum(y, 0.0).astype(jnp.bfloat16)  # ReLU in f32, re-pack bf16
        else:
            o_ref[...] = y.astype(o_ref.dtype)


def decoder_forward(x, params, *, tm: int = 256):
    """Fused forward pass of the whole Decoder as one Pallas TPU kernel."""
    n_layers = len(params)
    M, K0 = x.shape
    N_out = params[-1][0].shape[1]

    # bf16 activations / weights, f32 bias (+ f32 MXU accumulation).
    x_bf = x.astype(jnp.bfloat16)
    ws = [w.astype(jnp.bfloat16) for w, _ in params]
    bs = [b.astype(jnp.float32).reshape(1, -1) for _, b in params]

    # Lane-dense final output: pad the last layer's width to a multiple of 128.
    N_pad = 128 * pl.cdiv(N_out, 128)
    if N_pad != N_out:
        ws[-1] = jnp.pad(ws[-1], ((0, 0), (0, N_pad - N_out)))
        bs[-1] = jnp.pad(bs[-1], ((0, 0), (0, N_pad - N_out)))

    wb = []
    for w, b in zip(ws, bs):
        wb += [w, b]

    kernel = functools.partial(_fused_decoder_kernel, n_layers=n_layers)

    # Explicit scoped-VMEM budget sized from the actual operands (with slack),
    # capped well below v7x's 64 MiB physical VMEM.
    total_bytes = sum(int(a.size) * a.dtype.itemsize for a in [x_bf, *wb])
    total_bytes += int(M) * int(N_pad) * 4
    vmem_limit = int(min(48 << 20, max(8 << 20, 4 * total_bytes)))

    # TODO(synk): for very large decoder layers (K*N bf16 blocks approaching the
    # scoped VMEM budget, esp. on v7x) the weight BlockSpecs should be K/N-tiled
    # with an f32 VMEM accumulator + pl.when init/finalize instead of whole-array
    # residency.

    if M <= 512:
        # Small batch: no grid at all — one block, everything resident in VMEM.
        out = pl.pallas_call(
            kernel,
            out_shape=jax.ShapeDtypeStruct((M, N_pad), jnp.float32),
            in_specs=[pl.BlockSpec(memory_space=pltpu.MemorySpace.VMEM)]
            * (1 + 2 * n_layers),
            out_specs=pl.BlockSpec(memory_space=pltpu.MemorySpace.VMEM),
            compiler_params=pltpu.CompilerParams(vmem_limit_bytes=vmem_limit),
        )(x_bf, *wb)
    else:
        # Large batch: real M tiling, batch axis parallel (v7x megacore).
        M_pad = tm * pl.cdiv(M, tm)
        if M_pad != M:
            x_bf = jnp.pad(x_bf, ((0, M_pad - M), (0, 0)))

        in_specs = [pl.BlockSpec((tm, K0), lambda i: (i, 0))]
        for w, b in zip(ws, bs):
            in_specs.append(pl.BlockSpec(w.shape, lambda i: (0, 0)))
            in_specs.append(pl.BlockSpec(b.shape, lambda i: (0, 0)))

        out = pl.pallas_call(
            kernel,
            out_shape=jax.ShapeDtypeStruct((M_pad, N_pad), jnp.float32),
            grid_spec=pltpu.PrefetchScalarGridSpec(
                num_scalar_prefetch=0,
                grid=(M_pad // tm,),
                in_specs=in_specs,
                out_specs=pl.BlockSpec((tm, N_pad), lambda i: (i, 0)),
            ),
            compiler_params=pltpu.CompilerParams(
                dimension_semantics=("parallel",),
                vmem_limit_bytes=vmem_limit,
            ),
        )(x_bf, *wb)

    return out[:M, :N_out]


def make_decoder_params(input_dim: int, output_dim: int, key):
    """Mirror of Decoder.__init__: Linear layers for each consecutive pair in
    dim_list = [input_dim, 2*input_dim, 4*input_dim, ..., output_dim]."""
    dim_list = [input_dim]
    while 2 * dim_list[-1] < output_dim:
        dim_list.append(2 * dim_list[-1])
    dim_list.append(output_dim)

    params = []
    for i in range(len(dim_list) - 1):
        fan_in, fan_out = dim_list[i], dim_list[i + 1]
        key, kw, kb = jax.random.split(key, 3)
        bound = 1.0 / (fan_in ** 0.5)
        # PyTorch Linear stores W as (out, in); we keep (in, out) for x @ W.
        w = jax.random.uniform(kw, (fan_in, fan_out), jnp.float32, -bound, bound)
        b = jax.random.uniform(kb, (fan_out,), jnp.float32, -bound, bound)
        params.append((w, b))
    return params


def decoder_reference(x, params):
    """Pure-JAX reference with the same bf16 quantization of x/W and f32 math."""
    n_layers = len(params)
    h = x.astype(jnp.bfloat16)
    for i, (w, b) in enumerate(params):
        w_q = w.astype(jnp.bfloat16).astype(jnp.float32)
        y = jnp.dot(h.astype(jnp.float32), w_q) + b.astype(jnp.float32)
        if i < n_layers - 1:
            h = jnp.maximum(y, 0.0).astype(jnp.bfloat16)
        else:
            return y
    return h.astype(jnp.float32)  # unreachable for n_layers >= 1


if __name__ == "__main__":
    batch = 8
    input_dim = 32
    output_dim = 256  # -> dim_list = [32, 64, 128, 256]: 3 Linear layers

    key = jax.random.PRNGKey(0)
    key, kx = jax.random.split(key)
    x = jax.random.normal(kx, (batch, input_dim), jnp.float32)

    params = make_decoder_params(input_dim, output_dim, key)

    out = decoder_forward(x, params)
    out = jax.block_until_ready(out)

    ref = decoder_reference(x, params)
    assert out.shape == (batch, output_dim)
    assert jnp.allclose(out, ref, atol=1e-3, rtol=1e-3)

    print("KERNEL_OK")
</pallas_src>

<mosaic_0001>
module attributes {stable_mosaic.version = 11 : i64} {
  func.func @_fused_decoder_kernel(%arg0: memref<8x32xbf16, #tpu.memory_space<vmem>>, %arg1: memref<32x64xbf16, #tpu.memory_space<vmem>>, %arg2: memref<1x64xf32, #tpu.memory_space<vmem>>, %arg3: memref<64x128xbf16, #tpu.memory_space<vmem>>, %arg4: memref<1x128xf32, #tpu.memory_space<vmem>>, %arg5: memref<128x256xbf16, #tpu.memory_space<vmem>>, %arg6: memref<1x256xf32, #tpu.memory_space<vmem>>, %arg7: memref<8x256xf32, #tpu.memory_space<vmem>>) attributes {dimension_semantics = [], scalar_prefetch = 0 : i64, scratch_operands = 0 : i64, tpu.core_type = #tpu.core_type<tc>} {
    %c0 = arith.constant 0 : index
    %c0_0 = arith.constant 0 : index
    %0 = vector.load %arg0[%c0, %c0_0] : memref<8x32xbf16, #tpu.memory_space<vmem>>, vector<8x32xbf16>
    %c0_1 = arith.constant 0 : index
    %c0_2 = arith.constant 0 : index
    %1 = vector.load %arg1[%c0_1, %c0_2] : memref<32x64xbf16, #tpu.memory_space<vmem>>, vector<32x64xbf16>
    %c0_3 = arith.constant 0 : index
    %c0_4 = arith.constant 0 : index
    %2 = vector.load %arg2[%c0_3, %c0_4] : memref<1x64xf32, #tpu.memory_space<vmem>>, vector<1x64xf32>
    %cst = arith.constant dense<0.000000e+00> : vector<8x64xf32>
    %3 = tpu.matmul %0, %1, %cst {dimension_numbers = #tpu.dot_dimension_numbers<[1], [0], [0], [1], [0, 0, 1, 1], [], []>} : vector<8x32xbf16>, vector<32x64xbf16>, vector<8x64xf32> -> vector<8x64xf32>
    %4 = vector.broadcast %2 : vector<1x64xf32> to vector<8x64xf32>
    %5 = arith.addf %3, %4 : vector<8x64xf32>
    %cst_5 = arith.constant 0.000000e+00 : f32
    %6 = vector.broadcast %cst_5 : f32 to vector<8x64xf32>
    %7 = arith.maximumf %5, %6 : vector<8x64xf32>
    %8 = arith.truncf %7 : vector<8x64xf32> to vector<8x64xbf16>
    %c0_6 = arith.constant 0 : index
    %c0_7 = arith.constant 0 : index
    %9 = vector.load %arg3[%c0_6, %c0_7] : memref<64x128xbf16, #tpu.memory_space<vmem>>, vector<64x128xbf16>
    %c0_8 = arith.constant 0 : index
    %c0_9 = arith.constant 0 : index
    %10 = vector.load %arg4[%c0_8, %c0_9] : memref<1x128xf32, #tpu.memory_space<vmem>>, vector<1x128xf32>
    %cst_10 = arith.constant dense<0.000000e+00> : vector<8x128xf32>
    %11 = tpu.matmul %8, %9, %cst_10 {dimension_numbers = #tpu.dot_dimension_numbers<[1], [0], [0], [1], [0, 0, 1, 1], [], []>} : vector<8x64xbf16>, vector<64x128xbf16>, vector<8x128xf32> -> vector<8x128xf32>
    %12 = vector.broadcast %10 : vector<1x128xf32> to vector<8x128xf32>
    %13 = arith.addf %11, %12 : vector<8x128xf32>
    %cst_11 = arith.constant 0.000000e+00 : f32
    %14 = vector.broadcast %cst_11 : f32 to vector<8x128xf32>
    %15 = arith.maximumf %13, %14 : vector<8x128xf32>
    %16 = arith.truncf %15 : vector<8x128xf32> to vector<8x128xbf16>
    %c0_12 = arith.constant 0 : index
    %c0_13 = arith.constant 0 : index
    %17 = vector.load %arg5[%c0_12, %c0_13] : memref<128x256xbf16, #tpu.memory_space<vmem>>, vector<128x256xbf16>
    %c0_14 = arith.constant 0 : index
    %c0_15 = arith.constant 0 : index
    %18 = vector.load %arg6[%c0_14, %c0_15] : memref<1x256xf32, #tpu.memory_space<vmem>>, vector<1x256xf32>
    %cst_16 = arith.constant dense<0.000000e+00> : vector<8x256xf32>
    %19 = tpu.matmul %16, %17, %cst_16 {dimension_numbers = #tpu.dot_dimension_numbers<[1], [0], [0], [1], [0, 0, 1, 1], [], []>} : vector<8x128xbf16>, vector<128x256xbf16>, vector<8x256xf32> -> vector<8x256xf32>
    %20 = vector.broadcast %18 : vector<1x256xf32> to vector<8x256xf32>
    %21 = arith.addf %19, %20 : vector<8x256xf32>
    %c0_17 = arith.constant 0 : index
    %c0_18 = arith.constant 0 : index
    %22 = vector.load %arg7[%c0_17, %c0_18] : memref<8x256xf32, #tpu.memory_space<vmem>>, vector<8x256xf32>
    tpu.vector_store %arg7[%c0_17, %c0_18], %21 {strides = array<i32>} : memref<8x256xf32, #tpu.memory_space<vmem>>, vector<8x256xf32>,
    return
  }
}

</mosaic_0001>

<llo_original>
// kernel: tpu_custom_call.1
$region0: #{tpu_custom_call.1}
  #allocation0 [shape = 'u32[]', space=smem, size = 0x4, offset = 0x4, fixed_abs, tag = 'smem constant byte address 0x4 - core index']
  #allocation1 [shape = 'u32[72,128]{1,0:T(1,128)}', space=vmem, size = 0x9000, scoped, tag = 'internal scratch']
  %s0 = inlined_call_operand.hbm [shape: bf16[8,32], index: 0, kind: input, shape index: {}]
  %s1 = inlined_call_operand.hbm [shape: bf16[32,64], index: 1, kind: input, shape index: {}]
  %s2 = inlined_call_operand.vmem [shape: f32[1,64], index: 2, kind: input, shape index: {}]
  %s3 = inlined_call_operand.hbm [shape: bf16[64,128], index: 3, kind: input, shape index: {}]
  %s4 = inlined_call_operand.hbm [shape: f32[1,128], index: 4, kind: input, shape index: {}]
  %s5 = inlined_call_operand.hbm [shape: bf16[128,256], index: 5, kind: input, shape index: {}]
  %s6 = inlined_call_operand.vmem [shape: f32[1,256], index: 6, kind: input, shape index: {}]
  %s7 = inlined_call_operand.hbm [shape: f32[8,256], index: 7, kind: output, shape index: {}]
  %s8 = sld [smem:[#allocation0]]
  $region58: #{tpu_custom_call.1} parent=0
    _
  %s10 = ssub.s32 1, %s8
  %s11 = scalar_select 0, %s10, %s8
  $region1: #{tpu_custom_call.1} parent=0
    #allocation2 [shape = 'u8[2048]{0}', space=vmem, size = 0x800, scoped, tag = 'input window, operand 0, single buffered']
    #allocation3 [shape = 's32[1]{0}', space=sflag, size = 0x4, scoped, tag = 'scoped memory for tpu_custom_call.1']
    #allocation4 [shape = 's32[1]{0}', space=sflag, size = 0x4, scoped, tag = 'scoped memory for tpu_custom_call.1']
    #allocation5 [shape = 'u8[8192]{0}', space=vmem, size = 0x2000, scoped, tag = 'input window, operand 1, single buffered']
    #allocation6 [shape = 's32[1]{0}', space=sflag, size = 0x4, scoped, tag = 'scoped memory for tpu_custom_call.1']
    #allocation7 [shape = 'u8[16384]{0}', space=vmem, size = 0x4000, scoped, tag = 'input window, operand 3, single buffered']
    #allocation8 [shape = 'u8[512]{0}', space=vmem, size = 0x400, scoped, tag = 'input window, operand 4, single buffered']
    #allocation9 [shape = 's32[1]{0}', space=sflag, size = 0x4, scoped, tag = 'scoped memory for tpu_custom_call.1']
    #allocation10 [shape = 'u8[65536]{0}', space=vmem, size = 0x10000, scoped, tag = 'input window, operand 5, single buffered']
    #allocation11 [shape = 'u8[8192]{0}', space=vmem, size = 0x2000, scoped, tag = 'output window, operand 0, single buffered']
    %12 = vsyncpa [#allocation3], 0
    %13 = vsyncpa [#allocation6], 0
    %14 = vsyncpa [#allocation9], 0
    %15 = vsyncpa [#allocation4], 0
    // Predicated region
    $region2: #{tpu_custom_call.1} parent=1 // pred_check
      _
    $region3: #{tpu_custom_call.1} parent=1 // pred_check_branch
      %17 = sbr.rel (0) target = $region5
    $region4: #{tpu_custom_call.1} parent=1 // pred_region
      %19 = vsyncadd [#allocation3], 0
      %s21 = sshll.u32 %s0, 4
      %s22 = int_to_ptr.hbm [resolvable:$true] %s21
      %s23 = sshll.u32 [#allocation2], 4
      %s24 = int_to_ptr.vmem [resolvable:$true] %s23
      %26 = dma.hbm_to_vmem [thread:$0]  %s22, 64, %s24, [#allocation3]
    $region5: #{tpu_custom_call.1} parent=1 // pred_fallthru
      _
    // Predicated region
    $region6: #{tpu_custom_call.1} parent=1 // pred_check
      _
    $region7: #{tpu_custom_call.1} parent=1 // pred_check_branch
      %28 = sbr.rel (0) target = $region9
    $region8: #{tpu_custom_call.1} parent=1 // pred_region
      %30 = vsyncadd [#allocation6], 0
      %s31 = sshll.u32 %s1, 4
      %s32 = int_to_ptr.hbm [resolvable:$true] %s31
      %s33 = sshll.u32 [#allocation5], 4
      %s34 = int_to_ptr.vmem [resolvable:$true] %s33
      %39 = dma.hbm_to_vmem [thread:$0]  %s32, 256, %s34, [#allocation6], 64, 64, 4
    $region9: #{tpu_custom_call.1} parent=1 // pred_fallthru
      _
    // Predicated region
    $region10: #{tpu_custom_call.1} parent=1 // pred_check
      _
    $region11: #{tpu_custom_call.1} parent=1 // pred_check_branch
      %41 = sbr.rel (0) target = $region13
    $region12: #{tpu_custom_call.1} parent=1 // pred_region
      _
    $region13: #{tpu_custom_call.1} parent=1 // pred_fallthru
      _
    // Predicated region
    $region14: #{tpu_custom_call.1} parent=1 // pred_check
      _
    $region15: #{tpu_custom_call.1} parent=1 // pred_check_branch
      %43 = sbr.rel (0) target = $region17
    $region16: #{tpu_custom_call.1} parent=1 // pred_region
      %45 = vsyncadd [#allocation6], 0
      %s46 = sshll.u32 %s3, 4
      %s47 = int_to_ptr.hbm [resolvable:$true] %s46
      %s48 = sshll.u32 [#allocation7], 4
      %s49 = int_to_ptr.vmem [resolvable:$true] %s48
      %54 = dma.hbm_to_vmem [thread:$0]  %s47, 512, %s49, [#allocation6], 64, 64, 4
    $region17: #{tpu_custom_call.1} parent=1 // pred_fallthru
      _
    // Predicated region
    $region18: #{tpu_custom_call.1} parent=1 // pred_check
      _
    $region19: #{tpu_custom_call.1} parent=1 // pred_check_branch
      %56 = sbr.rel (0) target = $region21
    $region20: #{tpu_custom_call.1} parent=1 // pred_region
      %58 = vsyncadd [#allocation9], 0
      %s60 = sshll.u32 %s4, 4
      %s61 = int_to_ptr.hbm [resolvable:$true] %s60
      %s62 = sshll.u32 [#allocation8], 4
      %s63 = int_to_ptr.vmem [resolvable:$true] %s62
      %65 = dma.hbm_to_vmem [thread:$0]  %s61, 16, %s63, [#allocation9]
    $region21: #{tpu_custom_call.1} parent=1 // pred_fallthru
      _
    // Predicated region
    $region22: #{tpu_custom_call.1} parent=1 // pred_check
      _
    $region23: #{tpu_custom_call.1} parent=1 // pred_check_branch
      %67 = sbr.rel (0) target = $region25
    $region24: #{tpu_custom_call.1} parent=1 // pred_region
      %69 = vsyncadd [#allocation9], 0
      %s70 = sshll.u32 %s5, 4
      %s71 = int_to_ptr.hbm [resolvable:$true] %s70
      %s72 = sshll.u32 [#allocation10], 4
      %s73 = int_to_ptr.vmem [resolvable:$true] %s72
      %78 = dma.hbm_to_vmem [thread:$0]  %s71, 2048, %s73, [#allocation9], 128, 128, 8
    $region25: #{tpu_custom_call.1} parent=1 // pred_fallthru
      _
    // Predicated region
    $region26: #{tpu_custom_call.1} parent=1 // pred_check
      _
    $region27: #{tpu_custom_call.1} parent=1 // pred_check_branch
      %80 = sbr.rel (0) target = $region29
    $region28: #{tpu_custom_call.1} parent=1 // pred_region
      _
    $region29: #{tpu_custom_call.1} parent=1 // pred_fallthru
      _
    // Predicated region
    $region30: #{tpu_custom_call.1} parent=1 // pred_check
      _
    $region31: #{tpu_custom_call.1} parent=1 // pred_check_branch
      %82 = sbr.rel (0) target = $region33
    $region32: #{tpu_custom_call.1} parent=1 // pred_region
      %84 = dma.done [#allocation3], 64
    $region33: #{tpu_custom_call.1} parent=1 // pred_fallthru
      _
    // Predicated region
    $region34: #{tpu_custom_call.1} parent=1 // pred_check
      _
    $region35: #{tpu_custom_call.1} parent=1 // pred_check_branch
      %86 = sbr.rel (0) target = $region37
    $region36: #{tpu_custom_call.1} parent=1 // pred_region
      %88 = dma.done [#allocation6], 256
    $region37: #{tpu_custom_call.1} parent=1 // pred_fallthru
      _
    // Predicated region
    $region38: #{tpu_custom_call.1} parent=1 // pred_check
      _
    $region39: #{tpu_custom_call.1} parent=1 // pred_check_branch
      %90 = sbr.rel (0) target = $region41
    $region40: #{tpu_custom_call.1} parent=1 // pred_region
      %92 = dma.done [#allocation6], 512
    $region41: #{tpu_custom_call.1} parent=1 // pred_fallthru
      _
    // Predicated region
    $region42: #{tpu_custom_call.1} parent=1 // pred_check
      _
    $region43: #{tpu_custom_call.1} parent=1 // pred_check_branch
      %94 = sbr.rel (0) target = $region45
    $region44: #{tpu_custom_call.1} parent=1 // pred_region
      %96 = dma.done [#allocation9], 16
    $region45: #{tpu_custom_call.1} parent=1 // pred_fallthru
      _
    // Predicated region
    $region46: #{tpu_custom_call.1} parent=1 // pred_check
      _
    $region47: #{tpu_custom_call.1} parent=1 // pred_check_branch
      %98 = sbr.rel (0) target = $region49
    $region48: #{tpu_custom_call.1} parent=1 // pred_region
      %100 = dma.done [#allocation9], 2048
    $region49: #{tpu_custom_call.1} parent=1 // pred_fallthru
      _
    %v102 = vld [vmem:[#allocation2] sm:$0xf]
    %v103 = vld [vmem:[#allocation5] sm:$0xf]
    %v104 = vld [vmem:[#allocation5 + $0x4] sm:$0xf]
    %v105 = vld [vmem:[#allocation5 + $0x8] sm:$0xf]
    %v106 = vld [vmem:[#allocation5 + $0xc] sm:$0xf]
    %v107 = vld [vmem:[%s2] sm:$0x1]
    %v109 = vperm.slane %v107, 0
    %v115 = vunpack.c.l.b16 %v103
    %v116 = vunpack.c.l.b16 %v104
    %v117 = vunpack.c.l.b16 %v105
    %v118 = vunpack.c.l.b16 %v106
    %v119 = vpack.c.b16 %v116, %v115
    %v120 = vpack.c.b16 %v118, %v117
    %vm123 = vcmask 261120
    %v125 = vsel %vm123, %v102, 0
    %127 = vmatpush.bf16.msra.mxu0 0
    %128 = vmatpush.bf16.msra.mxu0 0
    %129 = vmatpush.bf16.msra.mxu0 0
    %130 = vmatpush.bf16.msra.mxu0 0
    %131 = vmatpush.bf16.msra.mxu0 0
    %132 = vmatpush.bf16.msra.mxu0 0
    %133 = vmatpush.bf16.msra.mxu0 %v120
    %134 = vmatpush.bf16.msra.mxu0 %v119
    %135 = vmatmul.bf16.gmra.mxu0 %v125
    %v136 = vpop.f32.mrf.mxu0
    %v137 = vadd.f32 %v109, %v136
    %v138 = vpop.f32.mrf.mxu0
    %139 = vdwg.mxu0
    %v140 = vmax.f32 %v137, 0.0
    %v141 = vpack.c.bf16 %v140, %v140
    %v142 = vld [vmem:[#allocation7] sm:$0xf]
    %v143 = vld [vmem:[#allocation7 + $0x4] sm:$0xf]
    %v144 = vld [vmem:[#allocation7 + $0x8] sm:$0xf]
    %v145 = vld [vmem:[#allocation7 + $0xc] sm:$0xf]
    %v146 = vld [vmem:[#allocation7 + $0x10] sm:$0xf]
    %v147 = vld [vmem:[#allocation7 + $0x14] sm:$0xf]
    %v148 = vld [vmem:[#allocation7 + $0x18] sm:$0xf]
    %v149 = vld [vmem:[#allocation7 + $0x1c] sm:$0xf]
    %v150 = vld [vmem:[#allocation8] sm:$0x1]
    %v152 = vperm.slane %v150, 0
    %v162 = vunpack.c.l.b16 %v142
    %v163 = vunpack.c.l.b16 %v143
    %v164 = vunpack.c.l.b16 %v144
    %v165 = vunpack.c.l.b16 %v145
    %v166 = vunpack.c.l.b16 %v146
    %v167 = vunpack.c.l.b16 %v147
    %v168 = vunpack.c.l.b16 %v148
    %v169 = vunpack.c.l.b16 %v149
    %v170 = vpack.c.b16 %v163, %v162
    %v171 = vpack.c.b16 %v165, %v164
    %v172 = vpack.c.b16 %v167, %v166
    %v173 = vpack.c.b16 %v169, %v168
    %vm178 = vcmask 523264
    %v180 = vsel %vm178, %v141, 0
    %182 = vmatpush.bf16.msra.mxu0 0
    %183 = vmatpush.bf16.msra.mxu0 0
    %184 = vmatpush.bf16.msra.mxu0 0
    %185 = vmatpush.bf16.msra.mxu0 0
    %186 = vmatpush.bf16.msra.mxu0 %v173
    %187 = vmatpush.bf16.msra.mxu0 %v172
    %188 = vmatpush.bf16.msra.mxu0 %v171
    %189 = vmatpush.bf16.msra.mxu0 %v170
    %190 = vmatmul.bf16.gmra.mxu0 %v180
    %v191 = vpop.f32.mrf.mxu0
    %v192 = vadd.f32 %v152, %v191
    %v193 = vpop.f32.mrf.mxu0
    %194 = vdwg.mxu0
    %v195 = vmax.f32 %v192, 0.0
    %v196 = vpack.c.bf16 %v195, %v195
    %v197 = vld [vmem:[#allocation10] sm:$0xff]
    %v198 = vld [vmem:[#allocation10 + $0x8] sm:$0xff]
    %v199 = vld [vmem:[#allocation10 + $0x10] sm:$0xff]
    %v200 = vld [vmem:[#allocation10 + $0x18] sm:$0xff]
    %v201 = vld [vmem:[#allocation10 + $0x20] sm:$0xff]
    %v202 = vld [vmem:[#allocation10 + $0x28] sm:$0xff]
    %v203 = vld [vmem:[#allocation10 + $0x30] sm:$0xff]
    %v204 = vld [vmem:[#allocation10 + $0x38] sm:$0xff]
    %v205 = vld [vmem:[#allocation10 + $0x40] sm:$0xff]
    %v206 = vld [vmem:[#allocation10 + $0x48] sm:$0xff]
    %v207 = vld [vmem:[#allocation10 + $0x50] sm:$0xff]
    %v208 = vld [vmem:[#allocation10 + $0x58] sm:$0xff]
    %v209 = vld [vmem:[#allocation10 + $0x60] sm:$0xff]
    %v210 = vld [vmem:[#allocation10 + $0x68] sm:$0xff]
    %v211 = vld [vmem:[#allocation10 + $0x70] sm:$0xff]
    %v212 = vld [vmem:[#allocation10 + $0x78] sm:$0xff]
    %v213 = vld [vmem:[%s6] sm:$0x3]
    %v215 = vperm.slane %v213, 0
    %v216 = vperm.slane %v213, 1
    %v235 = vunpack.c.l.b16 %v197
    %v236 = vunpack.c.h.b16 %v197
    %v237 = vunpack.c.l.b16 %v198
    %v238 = vunpack.c.h.b16 %v198
    %v239 = vunpack.c.l.b16 %v199
    %v240 = vunpack.c.h.b16 %v199
    %v241 = vunpack.c.l.b16 %v200
    %v242 = vunpack.c.h.b16 %v200
    %v243 = vunpack.c.l.b16 %v201
    %v244 = vunpack.c.h.b16 %v201
    %v245 = vunpack.c.l.b16 %v202
    %v246 = vunpack.c.h.b16 %v202
    %v247 = vunpack.c.l.b16 %v203
    %v248 = vunpack.c.h.b16 %v203
    %v249 = vunpack.c.l.b16 %v204
    %v250 = vunpack.c.h.b16 %v204
    %v251 = vunpack.c.l.b16 %v205
    %v252 = vunpack.c.h.b16 %v205
    %v253 = vunpack.c.l.b16 %v206
    %v254 = vunpack.c.h.b16 %v206
    %v255 = vunpack.c.l.b16 %v207
    %v256 = vunpack.c.h.b16 %v207
    %v257 = vunpack.c.l.b16 %v208
    %v258 = vunpack.c.h.b16 %v208
    %v259 = vunpack.c.l.b16 %v209
    %v260 = vunpack.c.h.b16 %v209
    %v261 = vunpack.c.l.b16 %v210
    %v262 = vunpack.c.h.b16 %v210
    %v263 = vunpack.c.l.b16 %v211
    %v264 = vunpack.c.h.b16 %v211
    %v265 = vunpack.c.l.b16 %v212
    %v266 = vunpack.c.h.b16 %v212
    %v267 = vpack.c.b16 %v237, %v235
    %v268 = vpack.c.b16 %v238, %v236
    %v269 = vpack.c.b16 %v241, %v239
    %v270 = vpack.c.b16 %v242, %v240
    %v271 = vpack.c.b16 %v245, %v243
    %v272 = vpack.c.b16 %v246, %v244
    %v273 = vpack.c.b16 %v249, %v247
    %v274 = vpack.c.b16 %v250, %v248
    %v275 = vpack.c.b16 %v253, %v251
    %v276 = vpack.c.b16 %v254, %v252
    %v277 = vpack.c.b16 %v257, %v255
    %v278 = vpack.c.b16 %v258, %v256
    %v279 = vpack.c.b16 %v261, %v259
    %v280 = vpack.c.b16 %v262, %v260
    %v281 = vpack.c.b16 %v265, %v263
    %v282 = vpack.c.b16 %v266, %v264
    %299 = vmatpush.bf16.msra.mxu0 %v281
    %300 = vmatpush.bf16.msra.mxu0 %v279
    %301 = vmatpush.bf16.msra.mxu0 %v277
    %302 = vmatpush.bf16.msra.mxu0 %v275
    %303 = vmatpush.bf16.msra.mxu0 %v273
    %304 = vmatpush.bf16.msra.mxu0 %v271
    %305 = vmatpush.bf16.msra.mxu0 %v269
    %306 = vmatpush.bf16.msra.mxu0 %v267
    %307 = vmatmul.bf16.gmra.mxu0 %v196
    %v308 = vpop.f32.mrf.mxu0
    %v309 = vadd.f32 %v215, %v308
    %v310 = vpop.f32.mrf.mxu0
    %311 = vdwg.mxu0
    %312 = vmatpush.bf16.msra.mxu0 %v282
    %313 = vmatpush.bf16.msra.mxu0 %v280
    %314 = vmatpush.bf16.msra.mxu0 %v278
    %315 = vmatpush.bf16.msra.mxu0 %v276
    %316 = vmatpush.bf16.msra.mxu0 %v274
    %317 = vmatpush.bf16.msra.mxu0 %v272
    %318 = vmatpush.bf16.msra.mxu0 %v270
    %319 = vmatpush.bf16.msra.mxu0 %v268
    %320 = vmatmul.bf16.gmra.mxu0 %v196
    %v321 = vpop.f32.mrf.mxu0
    %v322 = vadd.f32 %v216, %v321
    %v323 = vpop.f32.mrf.mxu0
    %324 = vdwg.mxu0
    %325 = vst [vmem:[#allocation11] sm:$0xff] %v309
    %326 = vst [vmem:[#allocation11 + $0x8] sm:$0xff] %v322
    // Predicated region
    $region50: #{tpu_custom_call.1} parent=1 // pred_check
      _
    $region51: #{tpu_custom_call.1} parent=1 // pred_check_branch
      %328 = sbr.rel (0) target = $region53
    $region52: #{tpu_custom_call.1} parent=1 // pred_region
      %330 = vsyncadd [#allocation4], 0
      %s332 = sshll.u32 [#allocation11], 4
      %s333 = int_to_ptr.vmem [resolvable:$true] %s332
      %s334 = sshll.u32 %s7, 4
      %s335 = int_to_ptr.hbm [resolvable:$true] %s334
      %337 = dma.vmem_to_hbm [thread:$0]  %s333, 256, %s335, [#allocation4]
    $region53: #{tpu_custom_call.1} parent=1 // pred_fallthru
      _
    // Predicated region
    $region54: #{tpu_custom_call.1} parent=1 // pred_check
      _
    $region55: #{tpu_custom_call.1} parent=1 // pred_check_branch
      %339 = sbr.rel (0) target = $region57
    $region56: #{tpu_custom_call.1} parent=1 // pred_region
      %341 = dma.done [#allocation4], 256
    $region57: #{tpu_custom_call.1} parent=1 // pred_fallthru
      _
    %342 = vsyncpa [#allocation3], 1
    %343 = vsyncpa [#allocation6], 1
    %344 = vsyncpa [#allocation9], 1
    %345 = vsyncpa [#allocation4], 1

</llo_original>
